<compile_context>
chip_gen: v5e
topology: v5e:2x2
jax: 0.10.0
libtpu: 0.0.40
codegen_flags: <defaults>
</compile_context>

<pallas_src>
import jax
import jax.numpy as jnp
from jax import lax
from jax.experimental import pallas as pl
from jax.experimental.pallas import tpu as pltpu


# --------------------------------------------------------------------------
# Kernels
# --------------------------------------------------------------------------
def _perception_kernel(q_ref, p_ref):
    # q_ref: (c_pad, n) native dtype; p_ref: (c_pad, c_pad) p_dtype.
    q = q_ref[...]
    # q @ q^T expressed as a shared-contraction dot_general: no (n, c)
    # transpose is materialized (MXU only), f32 accumulation.
    p = lax.dot_general(
        q, q,
        dimension_numbers=(((1,), (1,)), ((), ())),
        preferred_element_type=jnp.float32,
    )
    p = jnp.max(p, axis=-1, keepdims=True) - p          # row-max minus perception
    p_ref[...] = p.astype(p_ref.dtype)


def _cross_att_kernel(gamma_ref, p_ref, v_ref, o_ref):
    # gamma_ref: (1,) f32 in SMEM (scalar path)
    # p_ref    : (c_pad, c_pad)   perception, resident across the hw-tile axis
    # v_ref    : (c_pad, tile_hw) current spatial tile of the feature
    # o_ref    : (c_pad, tile_hw) output tile (feature dtype by default)
    v = v_ref[...]
    # MXU matmul in the operands' native dtype (bf16 path for bf16 inputs),
    # f32 accumulate; no f32 copy of the v tile is materialized beforehand.
    info = jnp.dot(p_ref[...], v, preferred_element_type=jnp.float32)
    # Epilogue in f32 vregs, single cast on the store.
    o_ref[...] = (gamma_ref[0] * info + v.astype(jnp.float32)).astype(o_ref.dtype)


# --------------------------------------------------------------------------
# Wrapper
# --------------------------------------------------------------------------
def _vmem_capacity_bytes(default=64 << 20):
    try:
        info = pltpu.get_tpu_info()
        return int(getattr(info, "vmem_capacity_bytes", default))
    except Exception:
        return default


def _pick_tile_hw(hw, c_pad, in_isz, out_isz, budget_bytes):
    """Largest multiple of 128 lanes whose per-tile VMEM footprint
    (double-buffered in/out blocks + f32 temporaries) fits `budget_bytes`."""
    if hw <= 128:
        return hw                                   # block dim == array dim
    per_col = c_pad * (2 * in_isz + 2 * out_isz + 8)  # +8 B: f32 info & upcast temps
    cols = max(128, (budget_bytes // (per_col * 128)) * 128)
    cap = -(-hw // 128) * 128                       # hw rounded up to 128 (ragged last tile)
    return int(min(cols, cap))


def cross_model_att(clip_feature, feature, gamma, out_dtype=None):
    """clip_feature: (b, c, h//2, w//2); feature: (b, c, h, w); gamma: (1,)."""
    b, c, h, w = feature.shape
    n = clip_feature.shape[2] * clip_feature.shape[3]
    hw = h * w

    in_dtype = feature.dtype
    out_dtype = in_dtype if out_dtype is None else out_dtype
    # perception dtype: torch-faithful f32 unless inputs are bf16, in which
    # case the p @ v matmul runs bf16 on the MXU (still f32 accumulate).
    p_dtype = jnp.bfloat16 if in_dtype == jnp.bfloat16 else jnp.float32

    in_isz = jnp.dtype(in_dtype).itemsize
    out_isz = jnp.dtype(out_dtype).itemsize
    p_isz = jnp.dtype(p_dtype).itemsize

    # Pad channels (sublane dim) to the packing granule when needed.
    sub = max(8, 32 // max(1, in_isz))              # 8 for f32, 16 for bf16
    c_pad = -(-c // sub) * sub

    q = clip_feature.reshape(b, c, n)
    v = feature.reshape(b, c, hw)
    if c_pad != c:
        q = jnp.pad(q, ((0, 0), (0, c_pad - c), (0, 0)))
        v = jnp.pad(v, ((0, 0), (0, c_pad - c), (0, 0)))
    g = jnp.asarray(gamma, jnp.float32).reshape(1)

    # Generation-aware VMEM limit: 64 MiB/TC (v7x) -> 56 MiB; 128 MiB parts
    # (v5e/v6e) -> ~100 MiB so bigger hw tiles amortize per-step overhead.
    vmem_cap = _vmem_capacity_bytes()
    vmem_limit = (100 << 20) if vmem_cap >= (100 << 20) else (56 << 20)

    # hw tile: largest 128-multiple fitting ~60% of the limit (headroom for
    # the resident perception block and compiler scratch).
    tile_budget = int(0.6 * vmem_limit) - 2 * c_pad * c_pad * p_isz
    tile_hw = _pick_tile_hw(hw, c_pad, in_isz, out_isz, tile_budget)
    n_tiles = pl.cdiv(hw, tile_hw)

    # ---- prologue: per-batch perception = rowmax(q q^T) - q q^T ------------
    perception = pl.pallas_call(
        _perception_kernel,
        out_shape=jax.ShapeDtypeStruct((b, c_pad, c_pad), p_dtype),
        grid_spec=pltpu.PrefetchScalarGridSpec(
            num_scalar_prefetch=0,
            grid=(b,),
            in_specs=[pl.BlockSpec((None, c_pad, n), lambda i: (i, 0, 0))],
            out_specs=pl.BlockSpec((None, c_pad, c_pad), lambda i: (i, 0, 0)),
        ),
        compiler_params=pltpu.CompilerParams(
            dimension_semantics=("parallel",),
            vmem_limit_bytes=vmem_limit,
        ),
    )(q)

    # ---- main kernel: out = gamma * (perception @ v) + v, tiled over hw ----
    out = pl.pallas_call(
        _cross_att_kernel,
        out_shape=jax.ShapeDtypeStruct((b, c_pad, hw), out_dtype),
        grid_spec=pltpu.PrefetchScalarGridSpec(
            num_scalar_prefetch=0,
            grid=(b, n_tiles),
            in_specs=[
                # gamma: scalar on the SMEM path (no VMEM block / no DMA stream).
                pl.BlockSpec(memory_space=pltpu.MemorySpace.SMEM),
                # perception: resident per batch (index_map ignores j).
                pl.BlockSpec((None, c_pad, c_pad), lambda i, j: (i, 0, 0)),
                # feature: spatial-tiled, lane-dense; last tile may be ragged.
                pl.BlockSpec((None, c_pad, tile_hw), lambda i, j: (i, 0, j)),
            ],
            out_specs=pl.BlockSpec((None, c_pad, tile_hw), lambda i, j: (i, 0, j)),
        ),
        compiler_params=pltpu.CompilerParams(
            # Stateless per tile -> both axes may shard across v7x's two TCs.
            dimension_semantics=("parallel", "parallel"),
            vmem_limit_bytes=vmem_limit,
        ),
    )(g, perception, v)

    if c_pad != c:
        out = out[:, :c, :]
    return out.reshape(b, c, h, w)


# --------------------------------------------------------------------------
# Test harness
# --------------------------------------------------------------------------
def fake_clip_encode_image(img, c, h, w):
    """Deterministic stand-in for CLIP encode_image followed by the
    .view(b, c, h//2, w//2) reinterpretation done in the module."""
    # TODO(synk): the frozen pretrained CLIP ViT-B/32 image encoder has no
    # in-script Pallas equivalent; replaced with a deterministic linear proj.
    b = img.shape[0]
    img224 = jax.image.resize(img, (b, 3, 224, 224), method="bilinear")
    small = jax.image.resize(img224, (b, 3, h // 2, w // 2), method="bilinear")
    wproj = (jnp.arange(c * 3, dtype=jnp.float32).reshape(c, 3) / (c * 3)) - 0.5
    return jnp.einsum("bixy,ci->bcxy", small, wproj)


def reference(clip_feature, feature, gamma):
    b, c, h, w = feature.shape
    q = clip_feature.reshape(b, c, -1).astype(jnp.float32)
    k = jnp.transpose(q, (0, 2, 1))
    p = jnp.einsum("bcn,bnd->bcd", q, k)
    p = jnp.max(p, axis=-1, keepdims=True) - p
    v = feature.reshape(b, c, -1).astype(jnp.float32)
    info = jnp.einsum("bcd,bdn->bcn", p, v).reshape(b, c, h, w)
    return gamma.reshape(()) * info + feature.astype(jnp.float32)


if __name__ == "__main__":
    key = jax.random.PRNGKey(0)
    k_img, k_feat = jax.random.split(key)

    b, c, h, w = 2, 4, 16, 16
    img = jax.random.normal(k_img, (b, 3, 16, 16), dtype=jnp.float32)
    feature = jax.random.normal(k_feat, (b, c, h, w), dtype=jnp.float32)

    # Module __init__ uses gamma = zeros(1); use a nonzero deterministic value
    # so the kernel's matmul path actually contributes to the output.
    gamma = jnp.array([0.5], dtype=jnp.float32)

    clip_feature = fake_clip_encode_image(img, c, h, w)

    out = cross_model_att(clip_feature, feature, gamma)
    out = jax.block_until_ready(out)

    ref = reference(clip_feature, feature, gamma)
    assert out.shape == (b, c, h, w)
    assert out.dtype == feature.dtype
    assert jnp.allclose(out.astype(jnp.float32), ref, atol=1e-4, rtol=1e-4), \
        "mismatch vs reference"

    print("KERNEL_OK")
</pallas_src>

<mosaic_0001>
module attributes {stable_mosaic.version = 11 : i64} {
  func.func @_perception_kernel(%arg0: i32, %arg1: memref<1x8x64xf32, #tpu.memory_space<vmem>>, %arg2: memref<1x8x8xf32, #tpu.memory_space<vmem>>) attributes {dimension_semantics = [#tpu.dimension_semantics<parallel>], iteration_bounds = array<i64: 2>, scalar_prefetch = 0 : i64, scratch_operands = 0 : i64, tpu.core_type = #tpu.core_type<tc>, window_params = [{transform_indices = @transform_0, window_bounds = array<i64: 1, 8, 64>}, {transform_indices = @transform_1, window_bounds = array<i64: 1, 8, 8>}]} {
    %c0 = arith.constant 0 : index
    %c0_0 = arith.constant 0 : index
    %c0_1 = arith.constant 0 : index
    %0 = vector.load %arg1[%c0, %c0_0, %c0_1] : memref<1x8x64xf32, #tpu.memory_space<vmem>>, vector<1x8x64xf32>
    %1 = vector.shape_cast %0 : vector<1x8x64xf32> to vector<8x64xf32>
    %cst = arith.constant dense<0.000000e+00> : vector<8x8xf32>
    %2 = tpu.matmul %1, %1, %cst {dimension_numbers = #tpu.dot_dimension_numbers<[1], [1], [0], [0], [0, 0, 1, 0], [], []>} : vector<8x64xf32>, vector<8x64xf32>, vector<8x8xf32> -> vector<8x8xf32>
    %cst_2 = arith.constant dense<0xFF800000> : vector<8xf32>
    %3 = vector.multi_reduction <maximumf>, %2, %cst_2 [1] : vector<8x8xf32> to vector<8xf32>
    %4 = vector.shape_cast %3 : vector<8xf32> to vector<8x1xf32>
    %5 = vector.broadcast %4 : vector<8x1xf32> to vector<8x8xf32>
    %6 = arith.subf %5, %2 : vector<8x8xf32>
    %c0_3 = arith.constant 0 : index
    %c0_4 = arith.constant 0 : index
    %c0_5 = arith.constant 0 : index
    %7 = vector.load %arg2[%c0_3, %c0_4, %c0_5] : memref<1x8x8xf32, #tpu.memory_space<vmem>>, vector<1x8x8xf32>
    %8 = vector.shape_cast %7 : vector<1x8x8xf32> to vector<8x8xf32>
    %9 = vector.shape_cast %6 : vector<8x8xf32> to vector<1x8x8xf32>
    tpu.vector_store %arg2[%c0_3, %c0_4, %c0_5], %9 {strides = array<i32>} : memref<1x8x8xf32, #tpu.memory_space<vmem>>, vector<1x8x8xf32>,
    return
  }
  func.func @transform_0(%arg0: i32) -> (i32, i32, i32) {
    %c0_i32 = arith.constant 0 : i32
    %c0_i32_0 = arith.constant 0 : i32
    %c0_i32_1 = arith.constant 0 : i32
    return %arg0, %c0_i32, %c0_i32_0 : i32, i32, i32
  }
  func.func @transform_1(%arg0: i32) -> (i32, i32, i32) {
    %c0_i32 = arith.constant 0 : i32
    %c0_i32_0 = arith.constant 0 : i32
    %c0_i32_1 = arith.constant 0 : i32
    return %arg0, %c0_i32, %c0_i32_0 : i32, i32, i32
  }
}

</mosaic_0001>

<llo_original>
// kernel: tpu_custom_call.1
$region0: #{tpu_custom_call.1}
  #allocation0 [shape = 'u32[]', space=smem, size = 0x4, offset = 0x4, fixed_abs, tag = 'smem constant byte address 0x4 - core index']
  #allocation1 [shape = 'u32[72,128]{1,0:T(1,128)}', space=vmem, size = 0x9000, scoped, tag = 'internal scratch']
  %s0 = inlined_call_operand.hbm [shape: f32[2,8,64], index: 0, kind: input, shape index: {}]
  %s1 = inlined_call_operand.hbm [shape: f32[2,8,8], index: 1, kind: output, shape index: {}]
  %s2 = sld [smem:[#allocation0]]
  $region41: #{tpu_custom_call.1} parent=0
    _
  %s4 = ssub.s32 1, %s2
  %s5 = scalar_select 0, %s4, %s2
  $region1: #{tpu_custom_call.1} parent=0
    #allocation2 [shape = 'u8[8192]{0}', space=vmem, size = 0x2000, scoped, tag = 'input window, operand 0']
    #allocation3 [shape = 's32[2]{0}', space=sflag, size = 0x8, scoped, tag = 'scoped memory for tpu_custom_call.1']
    #allocation4 [shape = 's32[2]{0}', space=sflag, size = 0x8, scoped, tag = 'scoped memory for tpu_custom_call.1']
    #allocation5 [shape = 'u8[8192]{0}', space=vmem, size = 0x2000, scoped, tag = 'output window, operand 0']
    %6 = vsyncpa [#allocation3], 0
    %s7 = scalar_lea.sflag [#allocation3], 1
    %8 = vsyncpa %s7, 0
    %9 = vsyncpa [#allocation4], 0
    %s10 = scalar_lea.sflag [#allocation4], 1
    %11 = vsyncpa %s10, 0
    loop: start=0, step=1, limit=4
    $region2: #{tpu_custom_call.1} parent=1 // loop_pre_header
      _
    $region3: #{tpu_custom_call.1} parent=1 // loop_header
      %s13 = sphi 0, %s17
      %p14 = scmp.ge.s32.totalorder %s13, 4
      %s23 = sphi 0, %s25
      %s26 = sphi 0, %s23
      %s27 = sphi 0, %s26
      %s43 = sphi 0, %s27
      %s49 = sphi 0, %s51
      %s52 = sphi 0, %s49
      %s53 = sphi 0, %s52
      %s69 = sphi 0, %s53
    $region4: #{tpu_custom_call.1} parent=1 // loop_header_branch
      %16 = sbr.rel (%p14) target = $region8
    $region5: #{tpu_custom_call.1} parent=1 // loop_body
      %s18 = ssub.s32 %s13, 1
      %s19 = ssub.s32 %s13, 2
      %s20 = sadd.s32 %s13, 1
      %s21 = ssub.s32 %s13, %s20
      %p22 = scmp.eq.s32.totalorder %s21, 0
      %s24 = sadd.s32 %s23, 1
      %s25 = scalar_select %p22, %s23, %s24
      %p28 = pneg %p22
      %p29 = scmp.eq.s32.totalorder %s13, 1
      %p30 = por %p28, %p29
      %p31 = scmp.ne.s32.totalorder %s23, %s26
      %p32 = scmp.eq.s32.totalorder %s13, 0
      %p33 = por %p31, %p32
      %p34 = scmp.ne.s32.totalorder %s23, %s26
      %p35 = scmp.eq.s32.totalorder %s18, 1
      %p36 = por %p34, %p35
      %p37 = scmp.ne.s32.totalorder %s26, %s27
      %p38 = scmp.eq.s32.totalorder %s18, 0
      %p39 = por %p37, %p38
      %p40 = scmp.ne.s32.totalorder %s26, %s27
      %p41 = scmp.eq.s32.totalorder %s19, 1
      %p42 = por %p40, %p41
      %p44 = scmp.ne.s32.totalorder %s27, %s43
      %p45 = scmp.eq.s32.totalorder %s19, 0
      %p46 = por %p44, %p45
      %s47 = ssub.s32 %s13, %s20
      %p48 = scmp.eq.s32.totalorder %s47, 0
      %s50 = sadd.s32 %s49, 1
      %s51 = scalar_select %p48, %s49, %s50
      %p54 = pneg %p48
      %p55 = scmp.eq.s32.totalorder %s13, 1
      %p56 = por %p54, %p55
      %p57 = scmp.ne.s32.totalorder %s49, %s52
      %p58 = scmp.eq.s32.totalorder %s13, 0
      %p59 = por %p57, %p58
      %p60 = scmp.ne.s32.totalorder %s49, %s52
      %p61 = scmp.eq.s32.totalorder %s18, 1
      %p62 = por %p60, %p61
      %p63 = scmp.ne.s32.totalorder %s52, %s53
      %p64 = scmp.eq.s32.totalorder %s18, 0
      %p65 = por %p63, %p64
      %p66 = scmp.ne.s32.totalorder %s52, %s53
      %p67 = scmp.eq.s32.totalorder %s19, 1
      %p68 = por %p66, %p67
      %p70 = scmp.ne.s32.totalorder %s53, %s69
      %p71 = scmp.eq.s32.totalorder %s19, 0
      %p72 = por %p70, %p71
      %p73 = scmp.le.s32.totalorder 1, %s13
      %p74 = scmp.lt.s32.totalorder %s13, 3
      %p75 = pnand %p73, %p74
      %p76 = pneg %p75
      // Predicated region
      $region9: #{tpu_custom_call.1} parent=5 // pred_check
        _
      $region10: #{tpu_custom_call.1} parent=5 // pred_check_branch
        %78 = sbr.rel (%p75) target = $region12
      $region11: #{tpu_custom_call.1} parent=5 // pred_region
        %s79 = ssub.s32 %s13, 1
      $region12: #{tpu_custom_call.1} parent=5 // pred_fallthru
        _
      %p80 = scmp.lt.s32.totalorder %s13, 2
      // Predicated region
      $region13: #{tpu_custom_call.1} parent=5 // pred_check
        %p81 = pneg %p80
      $region14: #{tpu_custom_call.1} parent=5 // pred_check_branch
        %83 = sbr.rel (%p81) target = $region16
      $region15: #{tpu_custom_call.1} parent=5 // pred_region
        // Predicated region
        $region17: #{tpu_custom_call.1} parent=15 // pred_check
          %p84 = pneg %p33
        $region18: #{tpu_custom_call.1} parent=15 // pred_check_branch
          %86 = sbr.rel (%p84) target = $region20
        $region19: #{tpu_custom_call.1} parent=15 // pred_region
          %s87 = sand.u32 %s23, 1
          %s88 = scalar_lea.sflag [#allocation3], %s87
          %s89 = sand.u32 %s23, 1
          %s90 = smul.addr %s89, 8
          %s91 = scalar_lea.vmem [#allocation2], %s90
          %93 = vsyncadd %s88, 0
          %s94 = smul.addr %s13, 8
          %s95 = scalar_lea.hbm %s0, %s94
          %s97 = sshll.u32 %s95, 4
          %s98 = int_to_ptr.hbm [resolvable:$true] %s97
          %s99 = sshll.u32 %s91, 4
          %s100 = int_to_ptr.vmem [resolvable:$true] %s99
          %102 = dma.hbm_to_vmem [thread:$0]  %s98, 128, %s100, %s88
        $region20: #{tpu_custom_call.1} parent=15 // pred_fallthru
          _
      $region16: #{tpu_custom_call.1} parent=5 // pred_fallthru
        _
      %p103 = scmp.le.s32.totalorder 1, %s13
      %p104 = scmp.lt.s32.totalorder %s13, 3
      %p105 = pnand %p103, %p104
      %p106 = pneg %p105
      // Predicated region
      $region21: #{tpu_custom_call.1} parent=5 // pred_check
        _
      $region22: #{tpu_custom_call.1} parent=5 // pred_check_branch
        %108 = sbr.rel (%p105) target = $region24
      $region23: #{tpu_custom_call.1} parent=5 // pred_region
        %s109 = ssub.s32 %s13, 1
        %s110 = sand.u32 %s26, 1
        %s111 = scalar_lea.sflag [#allocation3], %s110
        %s112 = sand.u32 %s26, 1
        %s113 = smul.addr %s112, 8
        %s114 = scalar_lea.vmem [#allocation2], %s113
        // Predicated region
        $region25: #{tpu_custom_call.1} parent=23 // pred_check
          %p115 = pneg %p39
        $region26: #{tpu_custom_call.1} parent=23 // pred_check_branch
          %117 = sbr.rel (%p115) target = $region28
        $region27: #{tpu_custom_call.1} parent=23 // pred_region
          %119 = dma.done %s111, 128
        $region28: #{tpu_custom_call.1} parent=23 // pred_fallthru
          _
        %s120 = sand.u32 %s26, 1
        %s121 = scalar_lea.sflag [#allocation3], %s120
        %s122 = sand.u32 %s26, 1
        %s123 = smul.addr %s122, 8
        %s124 = scalar_lea.vmem [#allocation2], %s123
        %p125 = pneg %p39
        %p126 = pneg %p36
        %p127 = pneg %p65
        %p128 = pneg %p62
        %s129 = sand.u32 %s52, 1
        %s130 = scalar_lea.sflag [#allocation4], %s129
        %s131 = sand.u32 %s52, 1
        %s132 = smul.addr %s131, 8
        %s133 = scalar_lea.vmem [#allocation5], %s132
        %v134 = vld [vmem:[%s114] sm:$0xff]
        %vm135 = vcmask 523264
        %v137 = vsel %vm135, %v134, 0
        %139 = vmatpush.xpose.msra.mxu0 0.0
        %140 = vmatpush.xpose.msra.mxu0 0.0
        %141 = vmatpush.xpose.msra.mxu0 0.0
        %142 = vmatpush.xpose.msra.mxu0 0.0
        %143 = vmatpush.xpose.msra.mxu0 0.0
        %144 = vmatpush.xpose.msra.mxu0 0.0
        %145 = vmatpush.xpose.msra.mxu0 0.0
        %146 = vmatpush.xpose.msra.mxu0 0.0
        %147 = vmatpush.xpose.msra.mxu0 0.0
        %148 = vmatpush.xpose.msra.mxu0 0.0
        %149 = vmatpush.xpose.msra.mxu0 0.0
        %150 = vmatpush.xpose.msra.mxu0 0.0
        %151 = vmatpush.xpose.msra.mxu0 0.0
        %152 = vmatpush.xpose.msra.mxu0 0.0
        %153 = vmatpush.xpose.msra.mxu0 0.0
        %154 = vmatpush.xpose.msra.mxu0 %v137
        %155 = vmatmul.f32.gmra.mxu0 %v137
        %v156 = vpop.f32.mrf.mxu0
        %v157 = vadd.f32 0.0, %v156
        %158 = vdwg.mxu0
        %vm159 = vcmask 64512
        %v160 = vsel %vm159, %v157, -inf
        %161 = vmax.xlane.f32.xlu0 %v160
        %v162 = vpop.xlane.xlu0 %161
        %v163 = vsub.f32 %v162, %v157
        %164 = vst.msk [vmem:[%s133] sm:$0xff] %vm159, %v163
        %s165 = sand.u32 %s52, 1
        %s166 = scalar_lea.sflag [#allocation4], %s165
        %s167 = sand.u32 %s52, 1
        %s168 = smul.addr %s167, 8
        %s169 = scalar_lea.vmem [#allocation5], %s168
        // Predicated region
        $region29: #{tpu_custom_call.1} parent=23 // pred_check
          %p170 = pneg %p62
        $region30: #{tpu_custom_call.1} parent=23 // pred_check_branch
          %172 = sbr.rel (%p170) target = $region32
        $region31: #{tpu_custom_call.1} parent=23 // pred_region
          %174 = vsyncadd %s166, 0
          %s175 = smul.addr %s18, 8
          %s176 = scalar_lea.hbm %s1, %s175
          %s178 = sshll.u32 %s169, 4
          %s179 = int_to_ptr.vmem [resolvable:$true] %s178
          %s180 = sshll.u32 %s176, 4
          %s181 = int_to_ptr.hbm [resolvable:$true] %s180
          %183 = dma.vmem_to_hbm [thread:$0]  %s179, 128, %s181, %s166
        $region32: #{tpu_custom_call.1} parent=23 // pred_fallthru
          _
      $region24: #{tpu_custom_call.1} parent=5 // pred_fallthru
        _
      %p184 = scmp.le.s32.totalorder 2, %s13
      // Predicated region
      $region33: #{tpu_custom_call.1} parent=5 // pred_check
        %p185 = pneg %p184
      $region34: #{tpu_custom_call.1} parent=5 // pred_check_branch
        %187 = sbr.rel (%p185) target = $region36
      $region35: #{tpu_custom_call.1} parent=5 // pred_region
        %s188 = ssub.s32 %s13, 2
        // Predicated region
        $region37: #{tpu_custom_call.1} parent=35 // pred_check
          %p189 = pneg %p68
        $region38: #{tpu_custom_call.1} parent=35 // pred_check_branch
          %191 = sbr.rel (%p189) target = $region40
        $region39: #{tpu_custom_call.1} parent=35 // pred_region
          %s192 = sand.u32 %s53, 1
          %s193 = scalar_lea.sflag [#allocation4], %s192
          %s194 = sand.u32 %s53, 1
          %s195 = smul.addr %s194, 8
          %s196 = scalar_lea.vmem [#allocation5], %s195
          %198 = dma.done %s193, 128
        $region40: #{tpu_custom_call.1} parent=35 // pred_fallthru
          _
      $region36: #{tpu_custom_call.1} parent=5 // pred_fallthru
        _
    $region6: #{tpu_custom_call.1} parent=1 // loop_footer
      %s17 = sadd.s32 1, %s13
    $region7: #{tpu_custom_call.1} parent=1 // loop_footer_branch
      %12 = sbr.rel target = $region3
    $region8: #{tpu_custom_call.1} parent=1 // loop_exit
      _
    %199 = vsyncpa [#allocation3], 1
    %s200 = scalar_lea.sflag [#allocation3], 1
    %201 = vsyncpa %s200, 1
    %202 = vsyncpa [#allocation4], 1
    %s203 = scalar_lea.sflag [#allocation4], 1
    %204 = vsyncpa %s203, 1

</llo_original>
